<compile_context>
chip_gen: v5e
topology: v5e:2x2
jax: 0.10.0
libtpu: 0.0.40
codegen_flags: <defaults>
</compile_context>

<pallas_src>
import jax
import jax.numpy as jnp
from jax.experimental import pallas as pl
from jax.experimental.pallas import tpu as pltpu


def _device_kind() -> str:
    try:
        return jax.devices()[0].device_kind.lower()
    except Exception:
        return ""


def _make_kernel(num_shards, steps, row_tile, tail_rows, inv_total):
    """Builds the reduction kernel with static tiling parameters baked in."""
    has_partial_tail = tail_rows != row_tile

    def _fold(dd):
        # Fold the row_tile rows onto an (8, lane_width) accumulator with cheap
        # VPU adds; the sublane-aligned reshape is free (no XLU, no VMEM copy).
        rt, lw = dd.shape
        if rt > 8 and rt % 8 == 0:
            return jnp.sum(dd.reshape(rt // 8, 8, lw), axis=0)
        return dd

    def kernel(x_ref, t_ref, loss_ref, acc_ref):
        k = pl.program_id(1)

        @pl.when(k == 0)
        def _():
            acc_ref[...] = jnp.zeros_like(acc_ref)

        d = x_ref[...].astype(jnp.float32) - t_ref[...].astype(jnp.float32)
        dd = d * d

        if has_partial_tail:
            # Only the very last block of the flattened array is ragged; mask
            # its out-of-bounds rows on that block alone.
            is_last = jnp.logical_and(pl.program_id(0) == num_shards - 1,
                                      k == steps - 1)

            @pl.when(is_last)
            def _():
                row_ids = jax.lax.broadcasted_iota(jnp.int32, dd.shape, 0)
                acc_ref[...] += _fold(jnp.where(row_ids < tail_rows, dd, 0.0))

            @pl.when(jnp.logical_not(is_last))
            def _():
                acc_ref[...] += _fold(dd)
        else:
            acc_ref[...] += _fold(dd)

        @pl.when(k == steps - 1)
        def _():
            # One-off cross-lane reduce + 1/N scale per shard; the XLU slot is
            # idle in this kernel so this is free and it removes the follow-up
            # XLA reduction dispatch over a partial-sum array.
            loss_ref[0, 0] = jnp.sum(acc_ref[...]) * jnp.float32(inv_total)

    return kernel


def content_loss(x, target, *, lane_width=None, tile_bytes=None, num_shards=None):
    """Returns (input_passthrough, mse_loss_scalar) — matches ContentLoss.forward."""
    assert x.shape == target.shape, "input/target shape mismatch"
    assert x.dtype == target.dtype, "input/target dtype mismatch"

    total = int(x.size)
    itemsize = jnp.dtype(x.dtype).itemsize
    # Sublane packing: 8 rows for f32, 16 for bf16, 32 for int8/fp8.
    sub = 8 * max(1, 4 // itemsize)

    kind = _device_kind()
    is_v7 = ("v7" in kind) or ("7x" in kind)
    newer = is_v7 or ("v6" in kind)
    if tile_bytes is None:
        # ~4 MiB/operand tiles on v6e/v7x (32 MiB scoped-VMEM default with
        # double-buffered inputs), ~2 MiB on v5e / unknown (16 MiB default).
        tile_bytes = (4 << 20) if newer else (2 << 20)
    if num_shards is None:
        # One shard per TensorCore: 2 on v7x, 1 on v5e/v6e (a second shard on a
        # single-TC chip is just a serial loop with extra init/finalize work).
        num_shards = 2 if is_v7 else 1

    x_flat = x.reshape(-1)
    t_flat = target.reshape(-1)

    if lane_width is None:
        lane_width = next((c for c in (512, 384, 256, 128) if total % c == 0), None)
    if lane_width is None or total % lane_width != 0:
        # TODO(synk): rare ragged case (element count not a multiple of 128) —
        # minimal zero-pad to 128 lanes; zero padding of BOTH operands adds 0
        # to the squared-diff sum and the divisor stays the true element count.
        lane_width = 128
        pad = (-total) % lane_width
        x_flat = jnp.pad(x_flat, (0, pad))
        t_flat = jnp.pad(t_flat, (0, pad))

    rows = x_flat.size // lane_width
    x2 = x_flat.reshape(rows, lane_width)   # free metadata reshape
    t2 = t_flat.reshape(rows, lane_width)

    # Row tile: full extent if it fits one tile (always a legal block shape),
    # otherwise a sublane-aligned tile of ~tile_bytes per operand.
    max_tile_rows = max(sub, (tile_bytes // (lane_width * itemsize)) // sub * sub)
    row_tile = rows if rows <= max_tile_rows else max_tile_rows
    nblocks = -(-rows // row_tile)
    tail_rows = rows - (nblocks - 1) * row_tile   # rows in the (maybe ragged) last block

    # Shards must evenly divide the block count so no shard indexes past the end.
    num_shards = max(1, min(num_shards, nblocks))
    while num_shards > 1 and nblocks % num_shards:
        num_shards -= 1
    steps = nblocks // num_shards

    acc_rows = 8 if (row_tile > 8 and row_tile % 8 == 0) else row_tile
    kernel = _make_kernel(num_shards, steps, row_tile, tail_rows, 1.0 / total)

    partial = pl.pallas_call(
        kernel,
        out_shape=jax.ShapeDtypeStruct((num_shards, 1), jnp.float32),
        grid_spec=pltpu.PrefetchScalarGridSpec(
            num_scalar_prefetch=0,
            grid=(num_shards, steps),
            in_specs=[
                pl.BlockSpec((row_tile, lane_width),
                             lambda p, k: (p * steps + k, 0)),
                pl.BlockSpec((row_tile, lane_width),
                             lambda p, k: (p * steps + k, 0)),
            ],
            # One f32 scalar per shard, written once at the last reduction step.
            out_specs=pl.BlockSpec((1, 1), lambda p, k: (p, 0),
                                   memory_space=pltpu.MemorySpace.SMEM),
            scratch_shapes=[pltpu.VMEM((acc_rows, lane_width), jnp.float32)],
        ),
        compiler_params=pltpu.CompilerParams(
            dimension_semantics=("parallel", "arbitrary"),
        ),
        cost_estimate=pl.CostEstimate(
            flops=3 * total,
            transcendentals=0,
            bytes_accessed=2 * total * itemsize + 4 * num_shards,
        ),
    )(x2, t2)

    loss = partial[0, 0] if num_shards == 1 else jnp.sum(partial)
    # The module returns its input unchanged: no kernel copy / no HBM write.
    return x, loss


if __name__ == "__main__":
    key = jax.random.PRNGKey(0)
    k1, k2, k3, k4 = jax.random.split(key, 4)

    # NCHW activations: batch=2, channels=4, spatial=16x16 (primary check).
    x = jax.random.normal(k1, (2, 4, 16, 16), dtype=jnp.float32)
    target = jax.random.normal(k2, (2, 4, 16, 16), dtype=jnp.float32)

    y, loss = content_loss(x, target)
    jax.block_until_ready((y, loss))

    ref_loss = jnp.mean((x - target) ** 2)
    assert jnp.allclose(y, x), "pass-through output mismatch"
    assert jnp.allclose(loss, ref_loss, rtol=1e-5, atol=1e-7), "mse loss mismatch"

    # Secondary check: force tiny tiles + 2 shards so the multi-block
    # accumulation, shard axis, and ragged-tail masking paths all execute.
    x2 = jax.random.normal(k3, (2, 4, 40, 16), dtype=jnp.float32)  # 5120 elems -> 10 rows of 512
    t2 = jax.random.normal(k4, (2, 4, 40, 16), dtype=jnp.float32)
    y2, loss2 = content_loss(x2, t2, tile_bytes=8 * 512 * 4, num_shards=2)
    jax.block_until_ready((y2, loss2))
    ref2 = jnp.mean((x2 - t2) ** 2)
    assert jnp.allclose(y2, x2), "pass-through output mismatch (case 2)"
    assert jnp.allclose(loss2, ref2, rtol=1e-5, atol=1e-7), "mse loss mismatch (case 2)"

    print("KERNEL_OK")
</pallas_src>

<mosaic_0001>
module attributes {stable_mosaic.version = 11 : i64} {
  func.func @kernel(%arg0: i32, %arg1: i32, %arg2: memref<4x512xf32, #tpu.memory_space<vmem>>, %arg3: memref<4x512xf32, #tpu.memory_space<vmem>>, %arg4: memref<1x1xf32, #tpu.memory_space<smem>>, %arg5: memref<4x512xf32, #tpu.memory_space<vmem>>) attributes {dimension_semantics = [#tpu.dimension_semantics<parallel>, #tpu.dimension_semantics<arbitrary>], iteration_bounds = array<i64: 1, 1>, scalar_prefetch = 0 : i64, scratch_operands = 1 : i64, tpu.core_type = #tpu.core_type<tc>, window_params = [{transform_indices = @transform_0, window_bounds = array<i64: 4, 512>}, {transform_indices = @transform_1, window_bounds = array<i64: 4, 512>}, {transform_indices = @transform_2, window_bounds = array<i64: 1, 1>}]} {
    %c0_i32 = arith.constant 0 : i32
    %0 = arith.cmpi eq, %arg1, %c0_i32 : i32
    %1 = arith.extui %0 : i1 to i32
    %c0_i32_0 = arith.constant 0 : i32
    %2 = arith.cmpi ne, %1, %c0_i32_0 : i32
    scf.if %2 {
      %cst = arith.constant 0.000000e+00 : f32
      %13 = vector.broadcast %cst : f32 to vector<4x512xf32>
      %c0_10 = arith.constant 0 : index
      %c0_11 = arith.constant 0 : index
      %14 = vector.load %arg5[%c0_10, %c0_11] : memref<4x512xf32, #tpu.memory_space<vmem>>, vector<4x512xf32>
      tpu.vector_store %arg5[%c0_10, %c0_11], %13 {strides = array<i32>} : memref<4x512xf32, #tpu.memory_space<vmem>>, vector<4x512xf32>,
    } else {
    }
    %c0 = arith.constant 0 : index
    %c0_1 = arith.constant 0 : index
    %3 = vector.load %arg2[%c0, %c0_1] : memref<4x512xf32, #tpu.memory_space<vmem>>, vector<4x512xf32>
    %c0_2 = arith.constant 0 : index
    %c0_3 = arith.constant 0 : index
    %4 = vector.load %arg3[%c0_2, %c0_3] : memref<4x512xf32, #tpu.memory_space<vmem>>, vector<4x512xf32>
    %5 = arith.subf %3, %4 : vector<4x512xf32>
    %6 = arith.mulf %5, %5 : vector<4x512xf32>
    %c0_4 = arith.constant 0 : index
    %c0_5 = arith.constant 0 : index
    %7 = vector.load %arg5[%c0_4, %c0_5] : memref<4x512xf32, #tpu.memory_space<vmem>>, vector<4x512xf32>
    %8 = arith.addf %7, %6 : vector<4x512xf32>
    %c0_6 = arith.constant 0 : index
    %c0_7 = arith.constant 0 : index
    %9 = vector.load %arg5[%c0_6, %c0_7] : memref<4x512xf32, #tpu.memory_space<vmem>>, vector<4x512xf32>
    tpu.vector_store %arg5[%c0_6, %c0_7], %8 {strides = array<i32>} : memref<4x512xf32, #tpu.memory_space<vmem>>, vector<4x512xf32>,
    %c0_i32_8 = arith.constant 0 : i32
    %10 = arith.cmpi eq, %arg1, %c0_i32_8 : i32
    %11 = arith.extui %10 : i1 to i32
    %c0_i32_9 = arith.constant 0 : i32
    %12 = arith.cmpi ne, %11, %c0_i32_9 : i32
    scf.if %12 {
      %c0_10 = arith.constant 0 : index
      %c0_11 = arith.constant 0 : index
      %13 = vector.load %arg5[%c0_10, %c0_11] : memref<4x512xf32, #tpu.memory_space<vmem>>, vector<4x512xf32>
      %14 = vector.shape_cast %13 : vector<4x512xf32> to vector<1x4x512xf32>
      %cst = arith.constant dense<0.000000e+00> : vector<1xf32>
      %15 = vector.multi_reduction <add>, %14, %cst [1, 2] : vector<1x4x512xf32> to vector<1xf32>
      %16 = vector.shape_cast %15 : vector<1xf32> to vector<1x1x1xf32>
      %17 = vector.extract %16[0, 0, 0] : f32 from vector<1x1x1xf32>
      %cst_12 = arith.constant 4.8828125E-4 : f32
      %18 = arith.mulf %17, %cst_12 : f32
      %c0_13 = arith.constant 0 : index
      %c0_14 = arith.constant 0 : index
      %19 = memref.load %arg4[%c0_13, %c0_14] : memref<1x1xf32, #tpu.memory_space<smem>>
      memref.store %18, %arg4[%c0_13, %c0_14] : memref<1x1xf32, #tpu.memory_space<smem>>
    } else {
    }
    return
  }
  func.func @transform_0(%arg0: i32, %arg1: i32) -> (i32, i32) {
    %c1_i32 = arith.constant 1 : i32
    %0 = arith.muli %arg0, %c1_i32 : i32
    %1 = arith.addi %0, %arg1 : i32
    %c0_i32 = arith.constant 0 : i32
    %c0_i32_0 = arith.constant 0 : i32
    return %1, %c0_i32 : i32, i32
  }
  func.func @transform_1(%arg0: i32, %arg1: i32) -> (i32, i32) {
    %c1_i32 = arith.constant 1 : i32
    %0 = arith.muli %arg0, %c1_i32 : i32
    %1 = arith.addi %0, %arg1 : i32
    %c0_i32 = arith.constant 0 : i32
    %c0_i32_0 = arith.constant 0 : i32
    return %1, %c0_i32 : i32, i32
  }
  func.func @transform_2(%arg0: i32, %arg1: i32) -> (i32, i32) {
    %c0_i32 = arith.constant 0 : i32
    %c0_i32_0 = arith.constant 0 : i32
    return %arg0, %c0_i32 : i32, i32
  }
}

</mosaic_0001>

<llo_original>
// kernel: tpu_custom_call.1
$region0: #{tpu_custom_call.1}
  #allocation0 [shape = 'u32[]', space=smem, size = 0x4, offset = 0x4, fixed_abs, tag = 'smem constant byte address 0x4 - core index']
  #allocation1 [shape = 'u32[72,128]{1,0:T(1,128)}', space=vmem, size = 0x9000, scoped, tag = 'internal scratch']
  #allocation2 [shape = 'f32[4,512]{1,0:T(4,128)}', space=vmem, size = 0x2000, scoped, tag = 'scratch operand']
  %s0 = inlined_call_operand.hbm [shape: f32[4,512], index: 0, kind: input, shape index: {}]
  %s1 = inlined_call_operand.hbm [shape: f32[4,512], index: 1, kind: input, shape index: {}]
  %s2 = inlined_call_operand.hbm [shape: f32[1,1], index: 2, kind: output, shape index: {}]
  %s3 = sld [smem:[#allocation0]]
  $region34: #{tpu_custom_call.1} parent=0
    _
  %s5 = ssub.s32 1, %s3
  %s6 = scalar_select 0, %s5, %s3
  $region1: #{tpu_custom_call.1} parent=0
    #allocation3 [shape = 'u8[8192]{0}', space=vmem, size = 0x2000, scoped, tag = 'input window, operand 0, single buffered']
    #allocation4 [shape = 's32[1]{0}', space=sflag, size = 0x4, scoped, tag = 'scoped memory for tpu_custom_call.1']
    #allocation5 [shape = 's32[1]{0}', space=sflag, size = 0x4, scoped, tag = 'scoped memory for tpu_custom_call.1']
    #allocation6 [shape = 'u8[8192]{0}', space=vmem, size = 0x2000, scoped, tag = 'input window, operand 1, single buffered']
    #allocation7 [shape = 's32[1]{0}', space=sflag, size = 0x4, scoped, tag = 'scoped memory for tpu_custom_call.1']
    #allocation8 [shape = 'u8[512]{0}', space=smem, size = 0x200, scoped, tag = 'output window, operand 0, single buffered']
    %7 = vsyncpa [#allocation4], 0
    %8 = vsyncpa [#allocation7], 0
    %9 = vsyncpa [#allocation5], 0
    // Predicated region
    $region2: #{tpu_custom_call.1} parent=1 // pred_check
      _
    $region3: #{tpu_custom_call.1} parent=1 // pred_check_branch
      %11 = sbr.rel (0) target = $region5
    $region4: #{tpu_custom_call.1} parent=1 // pred_region
      %s12 = sadd.s32 0, 0
      %14 = vsyncadd [#allocation4], 0
      %s15 = smul.addr %s12, 4
      %s16 = smul.addr %s15, 4
      %s17 = scalar_lea.hbm %s0, %s16
      %s19 = sshll.u32 %s17, 4
      %s20 = int_to_ptr.hbm [resolvable:$true] %s19
      %s21 = sshll.u32 [#allocation3], 4
      %s22 = int_to_ptr.vmem [resolvable:$true] %s21
      %24 = dma.hbm_to_vmem [thread:$0]  %s20, 256, %s22, [#allocation4]
    $region5: #{tpu_custom_call.1} parent=1 // pred_fallthru
      _
    // Predicated region
    $region6: #{tpu_custom_call.1} parent=1 // pred_check
      _
    $region7: #{tpu_custom_call.1} parent=1 // pred_check_branch
      %26 = sbr.rel (0) target = $region9
    $region8: #{tpu_custom_call.1} parent=1 // pred_region
      %s27 = sadd.s32 0, 0
      %29 = vsyncadd [#allocation7], 0
      %s30 = smul.addr %s27, 4
      %s31 = smul.addr %s30, 4
      %s32 = scalar_lea.hbm %s1, %s31
      %s34 = sshll.u32 %s32, 4
      %s35 = int_to_ptr.hbm [resolvable:$true] %s34
      %s36 = sshll.u32 [#allocation6], 4
      %s37 = int_to_ptr.vmem [resolvable:$true] %s36
      %39 = dma.hbm_to_vmem [thread:$0]  %s35, 256, %s37, [#allocation7]
    $region9: #{tpu_custom_call.1} parent=1 // pred_fallthru
      _
    // Predicated region
    $region10: #{tpu_custom_call.1} parent=1 // pred_check
      _
    $region11: #{tpu_custom_call.1} parent=1 // pred_check_branch
      %41 = sbr.rel (0) target = $region13
    $region12: #{tpu_custom_call.1} parent=1 // pred_region
      %43 = dma.done [#allocation4], 256
    $region13: #{tpu_custom_call.1} parent=1 // pred_fallthru
      _
    // Predicated region
    $region14: #{tpu_custom_call.1} parent=1 // pred_check
      _
    $region15: #{tpu_custom_call.1} parent=1 // pred_check_branch
      %45 = sbr.rel (0) target = $region17
    $region16: #{tpu_custom_call.1} parent=1 // pred_region
      %47 = dma.done [#allocation7], 256
    $region17: #{tpu_custom_call.1} parent=1 // pred_fallthru
      _
    %s48 = sadd.s32 0, 0
    %s49 = sadd.s32 0, 0
    %p50 = scmp.eq.s32.totalorder 0, 0
    // Predicated region
    $region18: #{tpu_custom_call.1} parent=1 // pred_check
      %p51 = pneg %p50
    $region19: #{tpu_custom_call.1} parent=1 // pred_check_branch
      %53 = sbr.rel (%p51) target = $region21
    $region20: #{tpu_custom_call.1} parent=1 // pred_region
      %54 = vst [vmem:[#allocation2] sm:$0xff] 0.0
      %55 = vst [vmem:[#allocation2 + $0x8] sm:$0xff] 0.0
    $region21: #{tpu_custom_call.1} parent=1 // pred_fallthru
      _
    %v56 = vld [vmem:[#allocation3] sm:$0xff]
    %v57 = vld [vmem:[#allocation3 + $0x8] sm:$0xff]
    %v58 = vld [vmem:[#allocation6] sm:$0xff]
    %v59 = vld [vmem:[#allocation6 + $0x8] sm:$0xff]
    %v60 = vsub.f32 %v56, %v58
    %v61 = vsub.f32 %v57, %v59
    %v62 = vmul.f32 %v60, %v60
    %v63 = vmul.f32 %v61, %v61
    %v64 = vld [vmem:[#allocation2] sm:$0xff]
    %v65 = vld [vmem:[#allocation2 + $0x8] sm:$0xff]
    %v66 = vadd.f32 %v64, %v62
    %v67 = vadd.f32 %v65, %v63
    %68 = vst [vmem:[#allocation2] sm:$0xff] %v66
    %69 = vst [vmem:[#allocation2 + $0x8] sm:$0xff] %v67
    // Predicated region
    $region22: #{tpu_custom_call.1} parent=1 // pred_check
      %p70 = pneg %p50
    $region23: #{tpu_custom_call.1} parent=1 // pred_check_branch
      %72 = sbr.rel (%p70) target = $region25
    $region24: #{tpu_custom_call.1} parent=1 // pred_region
      %v73 = vld [vmem:[#allocation2] sm:$0xff]
      %v74 = vld [vmem:[#allocation2 + $0x8] sm:$0xff]
      %77 = vst [vmem:[#allocation1] ss:$2 sm:$0xff] %v73
      %s78 = scalar_lea.vmem [#allocation1], 16
      %79 = vst [vmem:[%s78] ss:$2 sm:$0xff] %v74
      %v80 = vld.sshfl [vmem:[#allocation1] sm:$0xff pattern:$0x75316420]
      %v81 = vld.sshfl [vmem:[#allocation1 + $0x8] sm:$0xff pattern:$0x75316420]
      %v82 = vld.sshfl [vmem:[#allocation1 + $0x10] sm:$0xff pattern:$0x75316420]
      %v83 = vld.sshfl [vmem:[#allocation1 + $0x18] sm:$0xff pattern:$0x75316420]
      %vm88 = vcmask 1043456
      %v89 = vsel %vm88, %v80, 0.0
      %v90 = vsel %vm88, %v81, 0.0
      %v91 = vadd.f32 %v89, %v90
      %v92 = vsel %vm88, %v82, 0.0
      %v93 = vadd.f32 %v91, %v92
      %v94 = vsel %vm88, %v83, 0.0
      %v95 = vadd.f32 %v93, %v94
      %96 = vadd.xlane.f32.xlu0 %v95
      %v97 = vpop.xlane.xlu0 %96
      %v98 = vrot.slane %v97, 4
      %v99 = vadd.f32 %v97, %v98
      %v100 = vrot.slane %v99, 2
      %v101 = vadd.f32 %v99, %v100
      %v102 = vrot.slane %v101, 1
      %v103 = vadd.f32 %v101, %v102
      %s104 = vtos %v103
      %s105 = smul.f32 %s104, 0.00048828125
      %s106 = scalar_lea.smem [#allocation8], 0
      %107 = sst [smem:[%s106]] %s105
    $region25: #{tpu_custom_call.1} parent=1 // pred_fallthru
      _
    // Predicated region
    $region26: #{tpu_custom_call.1} parent=1 // pred_check
      _
    $region27: #{tpu_custom_call.1} parent=1 // pred_check_branch
      %109 = sbr.rel (0) target = $region29
    $region28: #{tpu_custom_call.1} parent=1 // pred_region
      %111 = vsyncadd [#allocation5], 0
      %s113 = sshll.u32 %s2, 4
      %s114 = int_to_ptr.hbm [resolvable:$true] %s113
      %116 = dma.smem_to_hbm [#allocation8], 16, %s114, [#allocation5]
    $region29: #{tpu_custom_call.1} parent=1 // pred_fallthru
      _
    // Predicated region
    $region30: #{tpu_custom_call.1} parent=1 // pred_check
      _
    $region31: #{tpu_custom_call.1} parent=1 // pred_check_branch
      %118 = sbr.rel (0) target = $region33
    $region32: #{tpu_custom_call.1} parent=1 // pred_region
      %120 = dma.done [#allocation5], 16
    $region33: #{tpu_custom_call.1} parent=1 // pred_fallthru
      _
    %121 = sfence
    %122 = vsyncpa [#allocation4], 1
    %123 = vsyncpa [#allocation7], 1
    %124 = vsyncpa [#allocation5], 1

</llo_original>
